<compile_context>
chip_gen: v5e
topology: v5e:2x2
jax: 0.10.0
libtpu: 0.0.40
codegen_flags: <defaults>
</compile_context>

<pallas_src>
import jax
import jax.numpy as jnp
from jax.experimental import pallas as pl
from jax.experimental.pallas import tpu as pltpu

EPSILON = 1e-8          # self.epsilon in the PyTorch module

_TO_PREF = 256          # sublane tile preference (multiple of 8)
_MIN_GRID_STEPS = 4     # keep >= this many grid steps ...
_MIN_STEPS_BYTES = 4 << 20   # ... whenever the whole slab exceeds this


def _cdiv(a, b):
    return -(-a // b)


def _tpu_generation():
    """Best-effort TPU generation number (0 if unknown)."""
    try:
        kind = jax.devices()[0].device_kind.lower()
    except Exception:
        return 0
    for gen in (7, 6, 5, 4, 3, 2):
        if str(gen) in kind:
            return gen
    return 0


def _target_tile_bytes(gen):
    # Review feedback: bigger tiles amortize the ~0.35 us per-grid-step cost.
    #   v7x (~3.2 TB/s HBM) -> 8 MiB tiles (needs vmem_limit_bytes raised)
    #   v6e (~1.35 TB/s)    -> 4 MiB tiles (fits the 32 MiB scoped default)
    #   v5e / unknown       -> 2 MiB tiles (fits the 16 MiB scoped default)
    if gen >= 7:
        return 8 << 20
    if gen == 6:
        return 4 << 20
    return 2 << 20


def _pick_tf(F, tf_pref):
    """Lane tile: full extent when it fits; otherwise a multiple of 128,
    preferring one that evenly divides F (avoids a padded last F block)."""
    if F <= tf_pref:
        return F
    if F % 128 == 0:
        units = F // 128
        for d in range(tf_pref // 128, 0, -1):
            if units % d == 0:
                return d * 128
    return tf_pref


def _select_tiles(O, F, itemsize, target_bytes):
    to = O if O <= _TO_PREF else _TO_PREF
    tf_pref = max(128, (target_bytes // max(1, to * itemsize)) // 128 * 128)
    tf = _pick_tf(F, tf_pref)

    # Guarantee a multi-step grid for medium/large slabs: the grid is what
    # gets sharded across v7x's two TensorCores with ("parallel","parallel")
    # semantics, and a 1-step grid also has no DMA pipelining at all.
    if O * F * itemsize > _MIN_STEPS_BYTES:
        while _cdiv(O, to) * _cdiv(F, tf) < _MIN_GRID_STEPS:
            # shrink the lane tile first (must stay a multiple of 128)
            cand_tf = (tf // 2) // 128 * 128
            if cand_tf >= 128:
                tf = cand_tf
                continue
            # then the sublane tile (must stay a multiple of 8)
            cand_to = (to // 2) // 8 * 8
            if cand_to >= 8:
                to = cand_to
                continue
            break
    return to, tf


def _weight_ib_kernel(params_ref, x_ref, o_ref):
    # params_ref: (3, TO, 1) f32 -> rows are [mu, logalpha, eps]
    mu = params_ref[0]        # (TO, 1)
    logalpha = params_ref[1]  # (TO, 1)
    eps = params_ref[2]       # (TO, 1)

    # reparameterize(mu, logalpha): EUP work, hidden under the x DMA.
    std = jnp.exp(0.5 * logalpha)
    phi = jnp.exp(std * eps - 0.5 * std * std)
    z_scale = phi * mu

    # get_mask_hard(epsilon): hard mask on |mu|
    z_scale = z_scale * (jnp.abs(mu) > EPSILON).astype(z_scale.dtype)

    # Broadcast multiply in x's dtype: cast the (TO, 1) scale once per tile so
    # a bf16 x tile stays in packed bf16 vregs (no f32 promote/demote pass).
    o_ref[...] = x_ref[...] * z_scale.astype(x_ref.dtype)


def weight_ib_forward(x, mu, logalpha, eps, *, donate_x=False):
    """x: (O, ...) array, mu/logalpha/eps: (O,) f32. Scales along dim 0.

    NOTE (perf): this kernel is pure HBM streaming (read + write every byte of
    x). The only order-of-magnitude levers live outside it: run x in bf16
    end-to-end, or fuse the per-channel scale into the consuming conv/matmul.
    """
    orig_shape = x.shape
    O = orig_shape[0]
    F = 1
    for d in orig_shape[1:]:
        F *= d
    x2d = x.reshape(O, F)
    itemsize = jnp.dtype(x.dtype).itemsize

    gen = _tpu_generation()
    to, tf = _select_tiles(O, F, itemsize, _target_tile_bytes(gen))
    grid = (_cdiv(O, to), _cdiv(F, tf))

    # Zero-pad the per-channel params to a multiple of TO so partial O tiles
    # never exp() out-of-bounds garbage (padded rows give finite values and
    # are never written back).
    o_pad = grid[0] * to
    params = jnp.zeros((3, o_pad), jnp.float32)
    params = params.at[0, :O].set(mu.astype(jnp.float32))
    params = params.at[1, :O].set(logalpha.astype(jnp.float32))
    params = params.at[2, :O].set(eps.astype(jnp.float32))
    params = params.reshape(3, o_pad, 1)

    # Scoped-VMEM budget: double-buffered x-in + out tiles, params, headroom.
    tile_bytes = to * tf * itemsize
    vmem_limit = 4 * tile_bytes + 2 * 3 * to * 4 + (8 << 20)
    vmem_limit = max(16 << 20, min(vmem_limit, 48 << 20))

    cost = pl.CostEstimate(
        flops=2 * O * F,
        transcendentals=2 * O,
        bytes_accessed=2 * O * F * itemsize + 12 * o_pad,
    )

    extra_kwargs = {}
    if donate_x:
        # Memory-footprint feature only (does not reduce HBM traffic): alias
        # x2d (input index 1 -- positional!) to the output buffer.
        extra_kwargs["input_output_aliases"] = {1: 0}

    out2d = pl.pallas_call(
        _weight_ib_kernel,
        out_shape=jax.ShapeDtypeStruct((O, F), x.dtype),
        grid=grid,
        in_specs=[
            # Per-channel params: block depends only on the O grid index, so
            # it is reused (not re-fetched) while sweeping the F tiles.
            pl.BlockSpec((3, to, 1), lambda i, j: (0, i, 0)),
            pl.BlockSpec((to, tf), lambda i, j: (i, j)),
        ],
        out_specs=pl.BlockSpec((to, tf), lambda i, j: (i, j)),
        compiler_params=pltpu.CompilerParams(
            dimension_semantics=("parallel", "parallel"),
            vmem_limit_bytes=vmem_limit,
        ),
        cost_estimate=cost,
        **extra_kwargs,
    )(params, x2d)

    return out2d.reshape(orig_shape)


def _reference(x, mu, logalpha, eps):
    std = jnp.exp(0.5 * logalpha)
    phi = jnp.exp(std * eps - 0.5 * std * std)
    z = phi * mu * (jnp.abs(mu) > EPSILON).astype(mu.dtype)
    new_shape = (x.shape[0],) + (1,) * (x.ndim - 1)
    return x * z.astype(x.dtype).reshape(new_shape)


def _run_case(key, shape, dtype):
    k_x, k_mu, k_la, k_eps = jax.random.split(key, 4)
    out_channels = shape[0]

    x = jax.random.normal(k_x, shape, dtype=dtype)

    # Parameter init matching the module's __init__:
    #   mu ~ N(1, init_var), logalpha ~ N(-init_mag, init_var), init_mag=9.
    init_mag, init_var = 9.0, 0.01
    mu = 1.0 + init_var * jax.random.normal(k_mu, (out_channels,), jnp.float32)
    logalpha = -init_mag + init_var * jax.random.normal(
        k_la, (out_channels,), jnp.float32)

    # TODO(synk): PyTorch draws eps fresh inside forward via .normal_(); here
    # it is a functional input (pltpu.prng_* could generate it in-kernel).
    eps = jax.random.normal(k_eps, (out_channels,), jnp.float32)

    out = weight_ib_forward(x, mu, logalpha, eps)
    out = jax.block_until_ready(out)

    ref = _reference(x, mu, logalpha, eps)
    assert out.shape == x.shape and out.dtype == x.dtype
    if dtype == jnp.float32:
        assert jnp.allclose(out, ref, atol=1e-5, rtol=1e-5)
    else:
        assert jnp.allclose(out.astype(jnp.float32), ref.astype(jnp.float32),
                            atol=1e-2, rtol=1e-2)


if __name__ == "__main__":
    key = jax.random.PRNGKey(0)
    k0, k1, k2 = jax.random.split(key, 3)

    # Small conv-weight-style tensor (primary test shape).
    _run_case(k0, (8, 4, 3, 3), jnp.float32)

    # Moderate shape exercising partial O tiles and the multi-tile grid path
    # (O=272 -> ragged 256-row tile with zero-padded params; F=2304).
    _run_case(k1, (272, 256, 3, 3), jnp.float32)

    # bf16 streaming path: the tile stays in packed bf16 vregs, z cast once.
    _run_case(k2, (128, 64, 4, 4), jnp.bfloat16)

    print("KERNEL_OK")
</pallas_src>

<mosaic_0001>
module attributes {stable_mosaic.version = 11 : i64} {
  func.func @_weight_ib_kernel(%arg0: i32, %arg1: i32, %arg2: memref<3x8x1xf32, #tpu.memory_space<vmem>>, %arg3: memref<8x36xf32, #tpu.memory_space<vmem>>, %arg4: memref<8x36xf32, #tpu.memory_space<vmem>>) attributes {dimension_semantics = [#tpu.dimension_semantics<parallel>, #tpu.dimension_semantics<parallel>], iteration_bounds = array<i64: 1, 1>, scalar_prefetch = 0 : i64, scratch_operands = 0 : i64, tpu.core_type = #tpu.core_type<tc>, window_params = [{transform_indices = @transform_0, window_bounds = array<i64: 3, 8, 1>}, {transform_indices = @transform_1, window_bounds = array<i64: 8, 36>}, {transform_indices = @transform_2, window_bounds = array<i64: 8, 36>}]} {
    %c0 = arith.constant 0 : index
    %c0_0 = arith.constant 0 : index
    %c0_1 = arith.constant 0 : index
    %0 = vector.load %arg2[%c0, %c0_0, %c0_1] : memref<3x8x1xf32, #tpu.memory_space<vmem>>, vector<1x8x1xf32>
    %1 = vector.shape_cast %0 : vector<1x8x1xf32> to vector<8x1xf32>
    %c1 = arith.constant 1 : index
    %c0_2 = arith.constant 0 : index
    %c0_3 = arith.constant 0 : index
    %2 = vector.load %arg2[%c1, %c0_2, %c0_3] : memref<3x8x1xf32, #tpu.memory_space<vmem>>, vector<1x8x1xf32>
    %3 = vector.shape_cast %2 : vector<1x8x1xf32> to vector<8x1xf32>
    %c2 = arith.constant 2 : index
    %c0_4 = arith.constant 0 : index
    %c0_5 = arith.constant 0 : index
    %4 = vector.load %arg2[%c2, %c0_4, %c0_5] : memref<3x8x1xf32, #tpu.memory_space<vmem>>, vector<1x8x1xf32>
    %5 = vector.shape_cast %4 : vector<1x8x1xf32> to vector<8x1xf32>
    %cst = arith.constant 5.000000e-01 : f32
    %6 = vector.broadcast %cst : f32 to vector<8x1xf32>
    %7 = arith.mulf %6, %3 : vector<8x1xf32>
    %8 = math.exp %7 : vector<8x1xf32>
    %9 = arith.mulf %8, %5 : vector<8x1xf32>
    %cst_6 = arith.constant 5.000000e-01 : f32
    %10 = vector.broadcast %cst_6 : f32 to vector<8x1xf32>
    %11 = arith.mulf %10, %8 : vector<8x1xf32>
    %12 = arith.mulf %11, %8 : vector<8x1xf32>
    %13 = arith.subf %9, %12 : vector<8x1xf32>
    %14 = math.exp %13 : vector<8x1xf32>
    %15 = arith.mulf %14, %1 : vector<8x1xf32>
    %16 = math.absf %1 : vector<8x1xf32>
    %cst_7 = arith.constant 9.99999993E-9 : f32
    %17 = vector.broadcast %cst_7 : f32 to vector<8x1xf32>
    %18 = arith.cmpf ogt, %16, %17 : vector<8x1xf32>
    %19 = arith.extui %18 : vector<8x1xi1> to vector<8x1xi32>
    %20 = arith.sitofp %19 : vector<8x1xi32> to vector<8x1xf32>
    %21 = arith.mulf %15, %20 : vector<8x1xf32>
    %c0_8 = arith.constant 0 : index
    %c0_9 = arith.constant 0 : index
    %22 = vector.load %arg3[%c0_8, %c0_9] : memref<8x36xf32, #tpu.memory_space<vmem>>, vector<8x36xf32>
    %23 = vector.broadcast %21 : vector<8x1xf32> to vector<8x36xf32>
    %24 = arith.mulf %22, %23 : vector<8x36xf32>
    %c0_10 = arith.constant 0 : index
    %c0_11 = arith.constant 0 : index
    %25 = vector.load %arg4[%c0_10, %c0_11] : memref<8x36xf32, #tpu.memory_space<vmem>>, vector<8x36xf32>
    tpu.vector_store %arg4[%c0_10, %c0_11], %24 {strides = array<i32>} : memref<8x36xf32, #tpu.memory_space<vmem>>, vector<8x36xf32>,
    return
  }
  func.func @transform_0(%arg0: i32, %arg1: i32) -> (i32, i32, i32) {
    %c0_i32 = arith.constant 0 : i32
    %c0_i32_0 = arith.constant 0 : i32
    %c0_i32_1 = arith.constant 0 : i32
    return %c0_i32, %arg0, %c0_i32_0 : i32, i32, i32
  }
  func.func @transform_1(%arg0: i32, %arg1: i32) -> (i32, i32) {
    %c0_i32 = arith.constant 0 : i32
    return %arg0, %arg1 : i32, i32
  }
  func.func @transform_2(%arg0: i32, %arg1: i32) -> (i32, i32) {
    %c0_i32 = arith.constant 0 : i32
    return %arg0, %arg1 : i32, i32
  }
}

</mosaic_0001>

<llo_original>
// kernel: tpu_custom_call.1
$region0: #{tpu_custom_call.1}
  #allocation0 [shape = 'u32[]', space=smem, size = 0x4, offset = 0x4, fixed_abs, tag = 'smem constant byte address 0x4 - core index']
  #allocation1 [shape = 'u32[72,128]{1,0:T(1,128)}', space=vmem, size = 0x9000, scoped, tag = 'internal scratch']
  %s0 = inlined_call_operand.vmem [shape: f32[3,8,1], index: 0, kind: input, shape index: {}]
  %s1 = inlined_call_operand.vmem [shape: f32[8,36], index: 1, kind: input, shape index: {}]
  %s2 = inlined_call_operand.hbm [shape: f32[8,36], index: 2, kind: output, shape index: {}]
  %s3 = sld [smem:[#allocation0]]
  $region18: #{tpu_custom_call.1} parent=0
    _
  %s5 = ssub.s32 1, %s3
  %s6 = scalar_select 0, %s5, %s3
  $region1: #{tpu_custom_call.1} parent=0
    #allocation2 [shape = 'u8[4096]{0}', space=vmem, size = 0x1000, scoped, tag = 'output window, operand 0, single buffered']
    #allocation3 [shape = 's32[1]{0}', space=sflag, size = 0x4, scoped, tag = 'scoped memory for tpu_custom_call.1']
    %7 = vsyncpa [#allocation3], 0
    // Predicated region
    $region2: #{tpu_custom_call.1} parent=1 // pred_check
      _
    $region3: #{tpu_custom_call.1} parent=1 // pred_check_branch
      %9 = sbr.rel (0) target = $region5
    $region4: #{tpu_custom_call.1} parent=1 // pred_region
      _
    $region5: #{tpu_custom_call.1} parent=1 // pred_fallthru
      _
    // Predicated region
    $region6: #{tpu_custom_call.1} parent=1 // pred_check
      _
    $region7: #{tpu_custom_call.1} parent=1 // pred_check_branch
      %11 = sbr.rel (0) target = $region9
    $region8: #{tpu_custom_call.1} parent=1 // pred_region
      _
    $region9: #{tpu_custom_call.1} parent=1 // pred_fallthru
      _
    %v12 = vld [vmem:[%s0] sm:$0xff]
    %s13 = scalar_lea.vmem %s0, 8
    %v14 = vld [vmem:[%s13] sm:$0xff]
    %s15 = scalar_lea.vmem %s0, 16
    %v16 = vld [vmem:[%s15] sm:$0xff]
    %v17 = vmul.f32 %v14, 0.5
    %v18 = vmul.f32 %v17, 1.442695
    %v19 = vpow.pop %v18
    %v20 = vmul.f32 %v19, %v16
    %v21 = vmul.f32 %v19, 0.5
    %v22 = vmul.f32 %v21, %v19
    %v23 = vsub.f32 %v20, %v22
    %v24 = vmul.f32 %v23, 1.442695
    %v25 = vpow.pop %v24
    %v26 = vmul.f32 %v25, %v12
    %v27 = vand.u32 2147483647, %v12
    %vm28 = vcmp.gt.f32.partialorder %v27, 1e-08
    %v29 = vsel %vm28, 1, 0
    %v30 = vcvt.s32.f32 %v29
    %v31 = vmul.f32 %v26, %v30
    %v32 = vld [vmem:[%s1] sm:$0xff]
    %34 = vset.pattern.permute.xlu0 0
    %35 = vperm.xlu0 %34, %v31
    %v36 = vpop.permute.xlu0 %35
    %v38 = vmul.f32 %v32, %v36
    %vm39 = vcmask 293888
    %40 = vst.msk [vmem:[#allocation2] sm:$0xff] %vm39, %v38
    // Predicated region
    $region10: #{tpu_custom_call.1} parent=1 // pred_check
      _
    $region11: #{tpu_custom_call.1} parent=1 // pred_check_branch
      %42 = sbr.rel (0) target = $region13
    $region12: #{tpu_custom_call.1} parent=1 // pred_region
      %44 = vsyncadd [#allocation3], 0
      %s46 = sshll.u32 [#allocation2], 4
      %s47 = int_to_ptr.vmem [resolvable:$true] %s46
      %s48 = sshll.u32 %s2, 4
      %s49 = int_to_ptr.hbm [resolvable:$true] %s48
      %51 = dma.vmem_to_hbm [thread:$0]  %s47, 128, %s49, [#allocation3]
    $region13: #{tpu_custom_call.1} parent=1 // pred_fallthru
      _
    // Predicated region
    $region14: #{tpu_custom_call.1} parent=1 // pred_check
      _
    $region15: #{tpu_custom_call.1} parent=1 // pred_check_branch
      %53 = sbr.rel (0) target = $region17
    $region16: #{tpu_custom_call.1} parent=1 // pred_region
      %55 = dma.done [#allocation3], 128
    $region17: #{tpu_custom_call.1} parent=1 // pred_fallthru
      _
    %56 = vsyncpa [#allocation3], 1

</llo_original>
